<compile_context>
chip_gen: v7x
topology: tpu7x:2x2x1
jax: 0.10.0
libtpu: 0.0.40
codegen_flags: <defaults>
</compile_context>

<pallas_src>
import math

import jax
import jax.numpy as jnp
from jax.experimental import pallas as pl
from jax.experimental.pallas import tpu as pltpu

LANE = 128
SUBLANE = 8


def _round_up(x: int, m: int) -> int:
    return ((x + m - 1) // m) * m


def _pad_to(a, shape):
    return jnp.pad(a, [(0, s - d) for d, s in zip(a.shape, shape)])


def _make_pre_kernel(resident: bool, tk: int):
    """out = relu(adj @ support + b) with support = x @ W precomputed.

    Accumulates adj @ support directly into the resident f32 output block.
    """

    def kernel(adj_ref, s_ref, b_ref, o_ref):
        k = pl.program_id(1)

        @pl.when(k == 0)
        def _():
            o_ref[...] = jnp.zeros_like(o_ref)

        if resident:
            start = pl.multiple_of(k * tk, tk)
            s_blk = s_ref[pl.ds(start, tk), :]
        else:
            s_blk = s_ref[...]

        o_ref[...] += jnp.dot(adj_ref[...], s_blk, preferred_element_type=jnp.float32)

        @pl.when(k == pl.num_programs(1) - 1)
        def _():
            o_ref[...] = jnp.maximum(o_ref[...] + b_ref[...], 0.0)

    return kernel


def _make_post_kernel(resident: bool, tk: int):
    """acc = adj @ x accumulated in f32 scratch; epilogue relu(acc @ W + b)."""

    def kernel(adj_ref, x_ref, w_ref, b_ref, o_ref, acc_ref):
        k = pl.program_id(1)

        @pl.when(k == 0)
        def _():
            acc_ref[...] = jnp.zeros_like(acc_ref)

        if resident:
            start = pl.multiple_of(k * tk, tk)
            x_blk = x_ref[pl.ds(start, tk), :]
        else:
            x_blk = x_ref[...]

        acc_ref[...] += jnp.dot(adj_ref[...], x_blk, preferred_element_type=jnp.float32)

        @pl.when(k == pl.num_programs(1) - 1)
        def _():
            # bf16 epilogue matmul (acc came from bf16 operands anyway);
            # bias + ReLU applied once per output row tile, stored in f32.
            out = jnp.dot(
                acc_ref[...].astype(jnp.bfloat16),
                w_ref[...],
                preferred_element_type=jnp.float32,
            )
            o_ref[...] = jnp.maximum(out + b_ref[...], 0.0)

    return kernel


def gcn_forward(
    x,
    adj,
    weight,
    bias,
    *,
    tm: int = 1024,
    tk: int = 2048,
    resident_bytes_budget: int = 16 * 1024 * 1024,
):
    """relu(adj @ (x @ weight) + bias), dense adjacency, as a Pallas kernel."""
    n_nodes, n_in = x.shape
    n_out = weight.shape[1]
    assert adj.shape == (n_nodes, n_nodes)
    assert weight.shape == (n_in, n_out)
    assert bias.shape == (n_out,)

    n_in_p = _round_up(n_in, LANE)
    n_out_p = _round_up(n_out, LANE)

    # Row-tile size: multiple of 8, clamped to the problem; try to get >= 2
    # balanced row tiles so the "parallel" axis can shard over v7x's 2 TCs.
    rows_needed = _round_up(n_nodes, SUBLANE)
    tm = min(tm, rows_needed)
    if tm >= rows_needed and rows_needed >= 2 * SUBLANE:
        tm = _round_up((rows_needed + 1) // 2, SUBLANE)
    # Contraction-tile size: multiple of 128, clamped.
    tk = min(tk, _round_up(n_nodes, LANE))

    rows_p = _round_up(n_nodes, tm)
    cols_p = _round_up(n_nodes, tk)
    grid = (rows_p // tm, cols_p // tk)

    # Zero padding contributes exact zeros to the accumulation.
    adj_p = _pad_to(adj, (rows_p, cols_p)).astype(jnp.bfloat16)
    b_p = _pad_to(bias.reshape(1, n_out), (1, n_out_p)).astype(jnp.float32)

    # Pick the association with the smaller inner width.
    pre_transform = n_out_p < n_in_p
    inner_width = n_out_p if pre_transform else n_in_p
    # Pin the inner matrix fully VMEM-resident if it fits the budget
    # (removes the (rows_p/tm)x redundant re-stream on a mem-bound kernel).
    resident = cols_p * inner_width * 2 <= resident_bytes_budget

    compiler_params = pltpu.CompilerParams(
        dimension_semantics=("parallel", "arbitrary"),
        vmem_limit_bytes=48 * 1024 * 1024,  # safe on v7x (64 MiB physical VMEM)
    )

    if pre_transform:
        # support = x @ W computed once in the wrapper: O(N * n_in * n_out),
        # negligible next to the O(N^2) adjacency matmul the kernel streams.
        support = jnp.dot(x.astype(jnp.float32), weight.astype(jnp.float32))
        s_p = _pad_to(support, (cols_p, n_out_p)).astype(jnp.bfloat16)
        if resident:
            s_spec = pl.BlockSpec((cols_p, n_out_p), lambda i, k: (0, 0))
        else:
            s_spec = pl.BlockSpec((tk, n_out_p), lambda i, k: (k, 0))

        out_p = pl.pallas_call(
            _make_pre_kernel(resident, tk),
            out_shape=jax.ShapeDtypeStruct((rows_p, n_out_p), jnp.float32),
            grid_spec=pltpu.PrefetchScalarGridSpec(
                num_scalar_prefetch=0,
                grid=grid,
                in_specs=[
                    # adjacency: the dominant HBM stream.
                    pl.BlockSpec((tm, tk), lambda i, k: (i, k)),
                    s_spec,
                    pl.BlockSpec((1, n_out_p), lambda i, k: (0, 0)),
                ],
                # Output tile fixed across k -> VMEM-resident f32 accumulator.
                out_specs=pl.BlockSpec((tm, n_out_p), lambda i, k: (i, 0)),
            ),
            compiler_params=compiler_params,
        )(adj_p, s_p, b_p)
    else:
        x_p = _pad_to(x, (cols_p, n_in_p)).astype(jnp.bfloat16)
        w_p = _pad_to(weight, (n_in_p, n_out_p)).astype(jnp.bfloat16)
        if resident:
            x_spec = pl.BlockSpec((cols_p, n_in_p), lambda i, k: (0, 0))
        else:
            x_spec = pl.BlockSpec((tk, n_in_p), lambda i, k: (k, 0))

        out_p = pl.pallas_call(
            _make_post_kernel(resident, tk),
            out_shape=jax.ShapeDtypeStruct((rows_p, n_out_p), jnp.float32),
            grid_spec=pltpu.PrefetchScalarGridSpec(
                num_scalar_prefetch=0,
                grid=grid,
                in_specs=[
                    pl.BlockSpec((tm, tk), lambda i, k: (i, k)),
                    x_spec,
                    # W and bias: constant block index -> VMEM-resident.
                    pl.BlockSpec((n_in_p, n_out_p), lambda i, k: (0, 0)),
                    pl.BlockSpec((1, n_out_p), lambda i, k: (0, 0)),
                ],
                out_specs=pl.BlockSpec((tm, n_out_p), lambda i, k: (i, 0)),
                scratch_shapes=[pltpu.VMEM((tm, n_in_p), jnp.float32)],
            ),
            compiler_params=compiler_params,
        )(adj_p, x_p, w_p, b_p)

    return out_p[:n_nodes, :n_out]


def init_gcn_params(key, n_in, n_out):
    """Matches GraphConvolution.reset_parameters: U(-stdv, stdv), stdv=1/sqrt(n_out)."""
    stdv = 1.0 / math.sqrt(n_out)
    kw, kb = jax.random.split(key)
    weight = jax.random.uniform(kw, (n_in, n_out), jnp.float32, -stdv, stdv)
    bias = jax.random.uniform(kb, (n_out,), jnp.float32, -stdv, stdv)
    return weight, bias


def _make_graph(key, n_nodes, n_in):
    kx, ka = jax.random.split(key)
    x = jax.random.normal(kx, (n_nodes, n_in), jnp.float32)
    a = (jax.random.uniform(ka, (n_nodes, n_nodes)) < 0.2).astype(jnp.float32)
    adj = a + a.T + jnp.eye(n_nodes, dtype=jnp.float32)
    adj = adj / jnp.maximum(adj.sum(axis=1, keepdims=True), 1.0)
    return x, adj


if __name__ == "__main__":
    key = jax.random.PRNGKey(0)
    k1, k2, kp1, kp2 = jax.random.split(key, 4)

    # Case 1: 32 nodes, 16 -> 64 features (in-kernel adj@x then @W path).
    x, adj = _make_graph(k1, 32, 16)
    weight, bias = init_gcn_params(kp1, 16, 64)
    out = jax.block_until_ready(gcn_forward(x, adj, weight, bias))
    ref = jnp.maximum(adj @ (x @ weight) + bias, 0.0)
    assert out.shape == (32, 64)
    assert jnp.allclose(out, ref, atol=2e-2, rtol=2e-2), "case1 mismatch vs reference"

    # Case 2: 48 nodes, 200 -> 64 features (precomputed-support path,
    # n_out_p < n_in_p; kernel accumulates straight into the output block).
    x2, adj2 = _make_graph(k2, 48, 200)
    weight2, bias2 = init_gcn_params(kp2, 200, 64)
    out2 = jax.block_until_ready(gcn_forward(x2, adj2, weight2, bias2))
    ref2 = jnp.maximum(adj2 @ (x2 @ weight2) + bias2, 0.0)
    assert out2.shape == (48, 64)
    assert jnp.allclose(out2, ref2, atol=2e-2, rtol=2e-2), "case2 mismatch vs reference"

    # dropout_rate is None in this config -> forward returns the ReLU output.
    # TODO(synk): training-mode dropout (dropout_rate != None) not implemented.
    print("KERNEL_OK")
</pallas_src>

<mosaic_0001>
module attributes {stable_mosaic.version = 11 : i64} {
  func.func @kernel(%arg0: i32, %arg1: i32, %arg2: memref<16x128xbf16, #tpu.memory_space<vmem>>, %arg3: memref<128x128xbf16, #tpu.memory_space<vmem>>, %arg4: memref<128x128xbf16, #tpu.memory_space<vmem>>, %arg5: memref<1x128xf32, #tpu.memory_space<vmem>>, %arg6: memref<16x128xf32, #tpu.memory_space<vmem>>, %arg7: memref<16x128xf32, #tpu.memory_space<vmem>>) attributes {dimension_semantics = [#tpu.dimension_semantics<parallel>, #tpu.dimension_semantics<arbitrary>], iteration_bounds = array<i64: 2, 1>, scalar_prefetch = 0 : i64, scratch_operands = 1 : i64, tpu.core_type = #tpu.core_type<tc>, window_params = [{transform_indices = @transform_0, window_bounds = array<i64: 16, 128>}, {pipeline_mode = #tpu.pipeline_mode<synchronous>, transform_indices = @transform_1, window_bounds = array<i64: 128, 128>}, {pipeline_mode = #tpu.pipeline_mode<synchronous>, transform_indices = @transform_2, window_bounds = array<i64: 128, 128>}, {pipeline_mode = #tpu.pipeline_mode<synchronous>, transform_indices = @transform_3, window_bounds = array<i64: 1, 128>}, {transform_indices = @transform_4, window_bounds = array<i64: 16, 128>}]} {
    %c0_i32 = arith.constant 0 : i32
    %0 = arith.cmpi eq, %arg1, %c0_i32 : i32
    %1 = arith.extui %0 : i1 to i32
    %c0_i32_0 = arith.constant 0 : i32
    %2 = arith.cmpi ne, %1, %c0_i32_0 : i32
    scf.if %2 {
      %cst_9 = arith.constant 0.000000e+00 : f32
      %15 = vector.broadcast %cst_9 : f32 to vector<16x128xf32>
      %c0_10 = arith.constant 0 : index
      %c0_11 = arith.constant 0 : index
      %16 = vector.load %arg7[%c0_10, %c0_11] : memref<16x128xf32, #tpu.memory_space<vmem>>, vector<16x128xf32>
      tpu.vector_store %arg7[%c0_10, %c0_11], %15 {strides = array<i32>} : memref<16x128xf32, #tpu.memory_space<vmem>>, vector<16x128xf32>,
    } else {
    }
    %c128_i32 = arith.constant 128 : i32
    %3 = arith.muli %arg1, %c128_i32 : i32
    %4 = tpu.assume_multiple %3, 128 : i32
    %5 = arith.index_cast %4 : i32 to index
    %c0 = arith.constant 0 : index
    %6 = vector.load %arg3[%5, %c0] : memref<128x128xbf16, #tpu.memory_space<vmem>>, vector<128x128xbf16>
    %c0_1 = arith.constant 0 : index
    %c0_2 = arith.constant 0 : index
    %7 = vector.load %arg7[%c0_1, %c0_2] : memref<16x128xf32, #tpu.memory_space<vmem>>, vector<16x128xf32>
    %c0_3 = arith.constant 0 : index
    %c0_4 = arith.constant 0 : index
    %8 = vector.load %arg2[%c0_3, %c0_4] : memref<16x128xbf16, #tpu.memory_space<vmem>>, vector<16x128xbf16>
    %cst = arith.constant dense<0.000000e+00> : vector<16x128xf32>
    %9 = tpu.matmul %8, %6, %cst {dimension_numbers = #tpu.dot_dimension_numbers<[1], [0], [0], [1], [0, 0, 1, 1], [], []>} : vector<16x128xbf16>, vector<128x128xbf16>, vector<16x128xf32> -> vector<16x128xf32>
    %10 = arith.addf %7, %9 : vector<16x128xf32>
    %c0_5 = arith.constant 0 : index
    %c0_6 = arith.constant 0 : index
    %11 = vector.load %arg7[%c0_5, %c0_6] : memref<16x128xf32, #tpu.memory_space<vmem>>, vector<16x128xf32>
    tpu.vector_store %arg7[%c0_5, %c0_6], %10 {strides = array<i32>} : memref<16x128xf32, #tpu.memory_space<vmem>>, vector<16x128xf32>,
    %c0_i32_7 = arith.constant 0 : i32
    %12 = arith.cmpi eq, %arg1, %c0_i32_7 : i32
    %13 = arith.extui %12 : i1 to i32
    %c0_i32_8 = arith.constant 0 : i32
    %14 = arith.cmpi ne, %13, %c0_i32_8 : i32
    scf.if %14 {
      %c0_9 = arith.constant 0 : index
      %c0_10 = arith.constant 0 : index
      %15 = vector.load %arg7[%c0_9, %c0_10] : memref<16x128xf32, #tpu.memory_space<vmem>>, vector<16x128xf32>
      %16 = arith.truncf %15 : vector<16x128xf32> to vector<16x128xbf16>
      %c0_11 = arith.constant 0 : index
      %c0_12 = arith.constant 0 : index
      %17 = vector.load %arg4[%c0_11, %c0_12] : memref<128x128xbf16, #tpu.memory_space<vmem>>, vector<128x128xbf16>
      %cst_13 = arith.constant dense<0.000000e+00> : vector<16x128xf32>
      %18 = tpu.matmul %16, %17, %cst_13 {dimension_numbers = #tpu.dot_dimension_numbers<[1], [0], [0], [1], [0, 0, 1, 1], [], []>} : vector<16x128xbf16>, vector<128x128xbf16>, vector<16x128xf32> -> vector<16x128xf32>
      %c0_14 = arith.constant 0 : index
      %c0_15 = arith.constant 0 : index
      %19 = vector.load %arg5[%c0_14, %c0_15] : memref<1x128xf32, #tpu.memory_space<vmem>>, vector<1x128xf32>
      %20 = vector.broadcast %19 : vector<1x128xf32> to vector<16x128xf32>
      %21 = arith.addf %18, %20 : vector<16x128xf32>
      %cst_16 = arith.constant 0.000000e+00 : f32
      %22 = vector.broadcast %cst_16 : f32 to vector<16x128xf32>
      %23 = arith.maximumf %21, %22 : vector<16x128xf32>
      %c0_17 = arith.constant 0 : index
      %c0_18 = arith.constant 0 : index
      %24 = vector.load %arg6[%c0_17, %c0_18] : memref<16x128xf32, #tpu.memory_space<vmem>>, vector<16x128xf32>
      tpu.vector_store %arg6[%c0_17, %c0_18], %23 {strides = array<i32>} : memref<16x128xf32, #tpu.memory_space<vmem>>, vector<16x128xf32>,
    } else {
    }
    return
  }
  func.func @transform_0(%arg0: i32, %arg1: i32) -> (i32, i32) {
    %c0_i32 = arith.constant 0 : i32
    return %arg0, %arg1 : i32, i32
  }
  func.func @transform_1(%arg0: i32, %arg1: i32) -> (i32, i32) {
    %c0_i32 = arith.constant 0 : i32
    %c0_i32_0 = arith.constant 0 : i32
    %c0_i32_1 = arith.constant 0 : i32
    return %c0_i32, %c0_i32_0 : i32, i32
  }
  func.func @transform_2(%arg0: i32, %arg1: i32) -> (i32, i32) {
    %c0_i32 = arith.constant 0 : i32
    %c0_i32_0 = arith.constant 0 : i32
    %c0_i32_1 = arith.constant 0 : i32
    return %c0_i32, %c0_i32_0 : i32, i32
  }
  func.func @transform_3(%arg0: i32, %arg1: i32) -> (i32, i32) {
    %c0_i32 = arith.constant 0 : i32
    %c0_i32_0 = arith.constant 0 : i32
    %c0_i32_1 = arith.constant 0 : i32
    return %c0_i32, %c0_i32_0 : i32, i32
  }
  func.func @transform_4(%arg0: i32, %arg1: i32) -> (i32, i32) {
    %c0_i32 = arith.constant 0 : i32
    %c0_i32_0 = arith.constant 0 : i32
    return %arg0, %c0_i32 : i32, i32
  }
}

</mosaic_0001>

<llo_original>
// kernel: tpu_custom_call.1
$region0: #{tpu_custom_call.1}
  #allocation0 [shape = 'u32[]', space=smem, size = 0x4, offset = 0x4, fixed_abs, tag = 'smem constant byte address 0x4 - core index']
  #allocation1 [shape = 'u32[144,128]{1,0:T(1,128)}', space=vmem, size = 0x12000, scoped, tag = 'internal scratch']
  #allocation2 [shape = 'f32[16,128]{1,0:T(8,128)}', space=vmem, size = 0x2000, scoped, tag = 'scratch operand']
  %s0 = inlined_call_operand.hbm [shape: bf16[32,128], index: 0, kind: input, shape index: {}]
  %s1 = inlined_call_operand.hbm [shape: bf16[128,128], index: 1, kind: input, shape index: {}]
  %s2 = inlined_call_operand.hbm [shape: bf16[128,128], index: 2, kind: input, shape index: {}]
  %s3 = inlined_call_operand.vmem [shape: f32[1,128], index: 3, kind: input, shape index: {}]
  %s4 = inlined_call_operand.hbm [shape: f32[32,128], index: 4, kind: output, shape index: {}]
  %s5 = sld [smem:[#allocation0]]
  $region69: #{tpu_custom_call.1} parent=0
    _
  %s7 = ssub.s32 1, %s5
  %s8 = scalar_select 0, %s7, %s5
  $region1: #{tpu_custom_call.1} parent=0
    #allocation3 [shape = 'u8[8192]{0}', space=vmem, size = 0x2000, scoped, tag = 'input window, operand 0']
    #allocation4 [shape = 's32[2]{0}', space=sflag, size = 0x8, scoped, tag = 'scoped memory for tpu_custom_call.1']
    #allocation5 [shape = 's32[2]{0}', space=sflag, size = 0x8, scoped, tag = 'scoped memory for tpu_custom_call.1']
    #allocation6 [shape = 'u8[32768]{0}', space=vmem, size = 0x8000, scoped, tag = 'input window, operand 1, single buffered']
    #allocation7 [shape = 's32[1]{0}', space=sflag, size = 0x4, scoped, tag = 'scoped memory for tpu_custom_call.1']
    #allocation8 [shape = 'u8[32768]{0}', space=vmem, size = 0x8000, scoped, tag = 'input window, operand 2, single buffered']
    #allocation9 [shape = 'u8[16384]{0}', space=vmem, size = 0x4000, scoped, tag = 'output window, operand 0']
    %9 = vsyncpa [#allocation4], 0
    %s10 = scalar_lea.sflag [#allocation4], 1
    %11 = vsyncpa %s10, 0
    %12 = vsyncpa [#allocation7], 0
    %13 = vsyncpa [#allocation5], 0
    %s14 = scalar_lea.sflag [#allocation5], 1
    %15 = vsyncpa %s14, 0
    loop: start=0, step=1, limit=4
    $region2: #{tpu_custom_call.1} parent=1 // loop_pre_header
      _
    $region3: #{tpu_custom_call.1} parent=1 // loop_header
      %s17 = sphi 0, %s21
      %p18 = scmp.ge.s32.totalorder %s17, 4
      %s24 = sphi 0, %s36
      %s25 = sphi 0, %s32
      %s26 = sphi 0, %s24
      %s27 = sphi 0, %s25
      %s28 = sphi 0, %s26
      %s29 = sphi 0, %s27
      %s41 = sphi 0, %s43
      %s44 = sphi 0, %s41
      %s45 = sphi 0, %s44
      %s61 = sphi 0, %s45
      %s65 = sphi 0, %s65
      %s67 = sphi 0, %s65
      %s68 = sphi 0, %s67
      %s82 = sphi 0, %s68
      %s86 = sphi 0, %s86
      %s88 = sphi 0, %s86
      %s89 = sphi 0, %s88
      %s103 = sphi 0, %s89
      %s107 = sphi 0, %s107
      %s109 = sphi 0, %s107
      %s110 = sphi 0, %s109
      %s124 = sphi 0, %s110
      %s130 = sphi 0, %s132
      %s133 = sphi 0, %s130
      %s134 = sphi 0, %s133
      %s150 = sphi 0, %s134
    $region4: #{tpu_custom_call.1} parent=1 // loop_header_branch
      %20 = sbr.rel (%p18) target = $region8
    $region5: #{tpu_custom_call.1} parent=1 // loop_body
      %s22 = ssub.s32 %s17, 1
      %s23 = ssub.s32 %s17, 2
      %s30 = sadd.s32 1, %s25
      %p31 = scmp.ge.s32.totalorder %s30, 1
      %s32 = scalar_select %p31, 0, %s30
      %s33 = sadd.s32 1, %s24
      %s34 = scalar_select %p31, %s33, %s24
      %p35 = scmp.ge.s32.totalorder %s34, 2
      %s36 = scalar_select %p35, 0, %s34
      %s37 = ssub.s32 %s24, %s36
      %s38 = ssub.s32 %s25, %s32
      %s39 = sor.u32 %s37, %s38
      %p40 = scmp.eq.s32.totalorder %s39, 0
      %s42 = sadd.s32 %s41, 1
      %s43 = scalar_select %p40, %s41, %s42
      %p46 = pneg %p40
      %p47 = scmp.eq.s32.totalorder %s17, 1
      %p48 = por %p46, %p47
      %p49 = scmp.ne.s32.totalorder %s41, %s44
      %p50 = scmp.eq.s32.totalorder %s17, 0
      %p51 = por %p49, %p50
      %p52 = scmp.ne.s32.totalorder %s41, %s44
      %p53 = scmp.eq.s32.totalorder %s22, 1
      %p54 = por %p52, %p53
      %p55 = scmp.ne.s32.totalorder %s44, %s45
      %p56 = scmp.eq.s32.totalorder %s22, 0
      %p57 = por %p55, %p56
      %p58 = scmp.ne.s32.totalorder %s44, %s45
      %p59 = scmp.eq.s32.totalorder %s23, 1
      %p60 = por %p58, %p59
      %p62 = scmp.ne.s32.totalorder %s45, %s61
      %p63 = scmp.eq.s32.totalorder %s23, 0
      %p64 = por %p62, %p63
      %s66 = sadd.s32 %s65, 1
      %p69 = scmp.eq.s32.totalorder %s17, 1
      %p70 = scmp.ne.s32.totalorder %s65, %s67
      %p71 = scmp.eq.s32.totalorder %s17, 0
      %p72 = por %p70, %p71
      %p73 = scmp.ne.s32.totalorder %s65, %s67
      %p74 = scmp.eq.s32.totalorder %s22, 1
      %p75 = por %p73, %p74
      %p76 = scmp.ne.s32.totalorder %s67, %s68
      %p77 = scmp.eq.s32.totalorder %s22, 0
      %p78 = por %p76, %p77
      %p79 = scmp.ne.s32.totalorder %s67, %s68
      %p80 = scmp.eq.s32.totalorder %s23, 1
      %p81 = por %p79, %p80
      %p83 = scmp.ne.s32.totalorder %s68, %s82
      %p84 = scmp.eq.s32.totalorder %s23, 0
      %p85 = por %p83, %p84
      %s87 = sadd.s32 %s86, 1
      %p90 = scmp.eq.s32.totalorder %s17, 1
      %p91 = scmp.ne.s32.totalorder %s86, %s88
      %p92 = scmp.eq.s32.totalorder %s17, 0
      %p93 = por %p91, %p92
      %p94 = scmp.ne.s32.totalorder %s86, %s88
      %p95 = scmp.eq.s32.totalorder %s22, 1
      %p96 = por %p94, %p95
      %p97 = scmp.ne.s32.totalorder %s88, %s89
      %p98 = scmp.eq.s32.totalorder %s22, 0
      %p99 = por %p97, %p98
      %p100 = scmp.ne.s32.totalorder %s88, %s89
      %p101 = scmp.eq.s32.totalorder %s23, 1
      %p102 = por %p100, %p101
      %p104 = scmp.ne.s32.totalorder %s89, %s103
      %p105 = scmp.eq.s32.totalorder %s23, 0
      %p106 = por %p104, %p105
      %s108 = sadd.s32 %s107, 1
      %p111 = scmp.eq.s32.totalorder %s17, 1
      %p112 = scmp.ne.s32.totalorder %s107, %s109
      %p113 = scmp.eq.s32.totalorder %s17, 0
      %p114 = por %p112, %p113
      %p115 = scmp.ne.s32.totalorder %s107, %s109
      %p116 = scmp.eq.s32.totalorder %s22, 1
      %p117 = por %p115, %p116
      %p118 = scmp.ne.s32.totalorder %s109, %s110
      %p119 = scmp.eq.s32.totalorder %s22, 0
      %p120 = por %p118, %p119
      %p121 = scmp.ne.s32.totalorder %s109, %s110
      %p122 = scmp.eq.s32.totalorder %s23, 1
      %p123 = por %p121, %p122
      %p125 = scmp.ne.s32.totalorder %s110, %s124
      %p126 = scmp.eq.s32.totalorder %s23, 0
      %p127 = por %p125, %p126
      %s128 = ssub.s32 %s24, %s36
      %p129 = scmp.eq.s32.totalorder %s128, 0
      %s131 = sadd.s32 %s130, 1
      %s132 = scalar_select %p129, %s130, %s131
      %p135 = pneg %p129
      %p136 = scmp.eq.s32.totalorder %s17, 1
      %p137 = por %p135, %p136
      %p138 = scmp.ne.s32.totalorder %s130, %s133
      %p139 = scmp.eq.s32.totalorder %s17, 0
      %p140 = por %p138, %p139
      %p141 = scmp.ne.s32.totalorder %s130, %s133
      %p142 = scmp.eq.s32.totalorder %s22, 1
      %p143 = por %p141, %p142
      %p144 = scmp.ne.s32.totalorder %s133, %s134
      %p145 = scmp.eq.s32.totalorder %s22, 0
      %p146 = por %p144, %p145
      %p147 = scmp.ne.s32.totalorder %s133, %s134
      %p148 = scmp.eq.s32.totalorder %s23, 1
      %p149 = por %p147, %p148
      %p151 = scmp.ne.s32.totalorder %s134, %s150
      %p152 = scmp.eq.s32.totalorder %s23, 0
      %p153 = por %p151, %p152
      %p154 = scmp.le.s32.totalorder 1, %s17
      %p155 = scmp.lt.s32.totalorder %s17, 3
      %p156 = pnand %p154, %p155
      %p157 = pneg %p156
      // Predicated region
      $region9: #{tpu_custom_call.1} parent=5 // pred_check
        _
      $region10: #{tpu_custom_call.1} parent=5 // pred_check_branch
        %159 = sbr.rel (%p156) target = $region12
      $region11: #{tpu_custom_call.1} parent=5 // pred_region
        %s160 = ssub.s32 %s17, 1
        // Predicated region
        $region13: #{tpu_custom_call.1} parent=11 // pred_check
          %p161 = pneg %p78
        $region14: #{tpu_custom_call.1} parent=11 // pred_check_branch
          %163 = sbr.rel (%p161) target = $region16
        $region15: #{tpu_custom_call.1} parent=11 // pred_region
          %s165 = ssub.s32 1024, 1024
          %166 = vsyncadd [#allocation7], %s165
          %s167 = sshll.u32 [#allocation6], 4
          %s168 = int_to_ptr.vmem [resolvable:$true] %s167
          %173 = dma.hbm_to_vmem [thread:$0]  %s1, 1024, %s168, [#allocation7], 64, 64, 4
        $region16: #{tpu_custom_call.1} parent=11 // pred_fallthru
          _
        // Predicated region
        $region17: #{tpu_custom_call.1} parent=11 // pred_check
          %p174 = pneg %p99
        $region18: #{tpu_custom_call.1} parent=11 // pred_check_branch
          %176 = sbr.rel (%p174) target = $region20
        $region19: #{tpu_custom_call.1} parent=11 // pred_region
          %s178 = ssub.s32 1024, 1024
          %179 = vsyncadd [#allocation7], %s178
          %s180 = sshll.u32 [#allocation8], 4
          %s181 = int_to_ptr.vmem [resolvable:$true] %s180
          %186 = dma.hbm_to_vmem [thread:$0]  %s2, 1024, %s181, [#allocation7], 64, 64, 4
        $region20: #{tpu_custom_call.1} parent=11 // pred_fallthru
          _
        // Predicated region
        $region21: #{tpu_custom_call.1} parent=11 // pred_check
          %p187 = pneg %p120
        $region22: #{tpu_custom_call.1} parent=11 // pred_check_branch
          %189 = sbr.rel (%p187) target = $region24
        $region23: #{tpu_custom_call.1} parent=11 // pred_region
          _
        $region24: #{tpu_custom_call.1} parent=11 // pred_fallthru
          _
      $region12: #{tpu_custom_call.1} parent=5 // pred_fallthru
        _
      %p190 = scmp.lt.s32.totalorder %s17, 2
      // Predicated region
      $region25: #{tpu_custom_call.1} parent=5 // pred_check
        %p191 = pneg %p190
      $region26: #{tpu_custom_call.1} parent=5 // pred_check_branch
        %193 = sbr.rel (%p191) target = $region28
      $region27: #{tpu_custom_call.1} parent=5 // pred_region
        // Predicated region
        $region29: #{tpu_custom_call.1} parent=27 // pred_check
          %p194 = pneg %p51
        $region30: #{tpu_custom_call.1} parent=27 // pred_check_branch
          %196 = sbr.rel (%p194) target = $region32
        $region31: #{tpu_custom_call.1} parent=27 // pred_region
          %s197 = sand.u32 %s41, 1
          %s198 = scalar_lea.sflag [#allocation4], %s197
          %s199 = sand.u32 %s41, 1
          %s200 = smul.addr %s199, 8
          %s201 = scalar_lea.vmem [#allocation3], %s200
          %s202 = smul.u32 2, %s24
          %s204 = ssub.s32 128, 128
          %205 = vsyncadd %s198, %s204
          %s206 = sadd.s32 %s25, %s202
          %s207 = smul.addr %s206, 64
          %s208 = scalar_lea.hbm %s0, %s207
          %s209 = sshll.u32 %s201, 4
          %s210 = int_to_ptr.vmem [resolvable:$true] %s209
          %215 = dma.hbm_to_vmem [thread:$0]  %s208, 128, %s210, %s198, 64, 64, 4
        $region32: #{tpu_custom_call.1} parent=27 // pred_fallthru
          _
      $region28: #{tpu_custom_call.1} parent=5 // pred_fallthru
        _
      %p216 = scmp.le.s32.totalorder 1, %s17
      %p217 = scmp.lt.s32.totalorder %s17, 3
      %p218 = pnand %p216, %p217
      %p219 = pneg %p218
      // Predicated region
      $region33: #{tpu_custom_call.1} parent=5 // pred_check
        _
      $region34: #{tpu_custom_call.1} parent=5 // pred_check_branch
        %221 = sbr.rel (%p218) target = $region36
      $region35: #{tpu_custom_call.1} parent=5 // pred_region
        %s222 = ssub.s32 %s17, 1
        %s223 = sand.u32 %s44, 1
        %s224 = scalar_lea.sflag [#allocation4], %s223
        %s225 = sand.u32 %s44, 1
        %s226 = smul.addr %s225, 8
        %s227 = scalar_lea.vmem [#allocation3], %s226
        // Predicated region
        $region37: #{tpu_custom_call.1} parent=35 // pred_check
          %p228 = pneg %p57
        $region38: #{tpu_custom_call.1} parent=35 // pred_check_branch
          %230 = sbr.rel (%p228) target = $region40
        $region39: #{tpu_custom_call.1} parent=35 // pred_region
          %231 = dma.done %s224, 128
        $region40: #{tpu_custom_call.1} parent=35 // pred_fallthru
          _
        // Predicated region
        $region41: #{tpu_custom_call.1} parent=35 // pred_check
          %p232 = pneg %p78
        $region42: #{tpu_custom_call.1} parent=35 // pred_check_branch
          %234 = sbr.rel (%p232) target = $region44
        $region43: #{tpu_custom_call.1} parent=35 // pred_region
          %235 = dma.done [#allocation7], 1024
        $region44: #{tpu_custom_call.1} parent=35 // pred_fallthru
          _
        // Predicated region
        $region45: #{tpu_custom_call.1} parent=35 // pred_check
          %p236 = pneg %p99
        $region46: #{tpu_custom_call.1} parent=35 // pred_check_branch
          %238 = sbr.rel (%p236) target = $region48
        $region47: #{tpu_custom_call.1} parent=35 // pred_region
          %239 = dma.done [#allocation7], 1024
        $region48: #{tpu_custom_call.1} parent=35 // pred_fallthru
          _
        %s240 = sand.u32 %s44, 1
        %s241 = scalar_lea.sflag [#allocation4], %s240
        %s242 = sand.u32 %s44, 1
        %s243 = smul.addr %s242, 8
        %s244 = scalar_lea.vmem [#allocation3], %s243
        %p245 = pneg %p57
        %p246 = pneg %p54
        %p247 = pneg %p78
        %p248 = pneg %p75
        %p249 = pneg %p99
        %p250 = pneg %p96
        %p251 = pneg %p120
        %p252 = pneg %p117
        %p253 = pneg %p146
        %p254 = pneg %p143
        %s255 = sand.u32 %s133, 1
        %s256 = scalar_lea.sflag [#allocation5], %s255
        %s257 = sand.u32 %s133, 1
        %s258 = smul.addr %s257, 16
        %s259 = scalar_lea.vmem [#allocation9], %s258
        %s260 = smul.u32 2, %s26
        %s261 = smul.u32 2, %s26
        %p263 = scmp.eq.s32.totalorder %s27, 0
        // Predicated region
        $region49: #{tpu_custom_call.1} parent=35 // pred_check
          %p264 = pneg %p263
        $region50: #{tpu_custom_call.1} parent=35 // pred_check_branch
          %266 = sbr.rel (%p264) target = $region52
        $region51: #{tpu_custom_call.1} parent=35 // pred_region
          %267 = vst [vmem:[#allocation2] sm:$0xff] 0.0
          %268 = vst [vmem:[#allocation2 + $0x8] sm:$0xff] 0.0
        $region52: #{tpu_custom_call.1} parent=35 // pred_fallthru
          _
        %s269 = smul.u32 %s27, 128
        %s270 = sshra.s32 %s269, 3
        %s271 = sand.u32 %s269, 7
        %s272 = smul.addr %s270, 4
        %s273 = scalar_lea.vmem [#allocation6], %s272
        %v274 = vld [vmem:[%s273] sm:$0xf]
        %v275 = vld [vmem:[%s273 + $0x4] sm:$0xf]
        %v276 = vld [vmem:[%s273 + $0x8] sm:$0xf]
        %v277 = vld [vmem:[%s273 + $0xc] sm:$0xf]
        %v278 = vld [vmem:[%s273 + $0x10] sm:$0xf]
        %v279 = vld [vmem:[%s273 + $0x14] sm:$0xf]
        %v280 = vld [vmem:[%s273 + $0x18] sm:$0xf]
        %v281 = vld [vmem:[%s273 + $0x1c] sm:$0xf]
        %v282 = vld [vmem:[%s273 + $0x20] sm:$0xf]
        %v283 = vld [vmem:[%s273 + $0x24] sm:$0xf]
        %v284 = vld [vmem:[%s273 + $0x28] sm:$0xf]
        %v285 = vld [vmem:[%s273 + $0x2c] sm:$0xf]
        %v286 = vld [vmem:[%s273 + $0x30] sm:$0xf]
        %v287 = vld [vmem:[%s273 + $0x34] sm:$0xf]
        %v288 = vld [vmem:[%s273 + $0x38] sm:$0xf]
        %v289 = vld [vmem:[%s273 + $0x3c] sm:$0xf]
        %v290 = vld [vmem:[#allocation2] sm:$0xff]
        %v291 = vld [vmem:[#allocation2 + $0x8] sm:$0xff]
        %v292 = vld [vmem:[%s227] sm:$0xf]
        %v293 = vld [vmem:[%s227 + $0x4] sm:$0xf]
        %v296 = vunpack.c.l.b16 %v292
        %v297 = vunpack.c.l.b16 %v293
        %v298 = vpack.c.b16 %v297, %v296
        %v316 = vunpack.c.l.b16 %v274
        %v317 = vunpack.c.l.b16 %v275
        %v318 = vunpack.c.l.b16 %v276
        %v319 = vunpack.c.l.b16 %v277
        %v320 = vunpack.c.l.b16 %v278
        %v321 = vunpack.c.l.b16 %v279
        %v322 = vunpack.c.l.b16 %v280
        %v323 = vunpack.c.l.b16 %v281
        %v324 = vunpack.c.l.b16 %v282
        %v325 = vunpack.c.l.b16 %v283
        %v326 = vunpack.c.l.b16 %v284
        %v327 = vunpack.c.l.b16 %v285
        %v328 = vunpack.c.l.b16 %v286
        %v329 = vunpack.c.l.b16 %v287
        %v330 = vunpack.c.l.b16 %v288
        %v331 = vunpack.c.l.b16 %v289
        %v332 = vpack.c.b16 %v317, %v316
        %v333 = vpack.c.b16 %v319, %v318
        %v334 = vpack.c.b16 %v321, %v320
        %v335 = vpack.c.b16 %v323, %v322
        %v336 = vpack.c.b16 %v325, %v324
        %v337 = vpack.c.b16 %v327, %v326
        %v338 = vpack.c.b16 %v329, %v328
        %v339 = vpack.c.b16 %v331, %v330
        %348 = vmatprep.subr.bf16.mxu0 0
        %349 = vmatpush1.bf16.msra.mxu0 %v332
        %350 = vmatprep.subr.bf16.mxu0 0
        %351 = vmatpush1.bf16.msra.mxu0 %v333
        %352 = vmatprep.subr.bf16.mxu0 0
        %353 = vmatpush1.bf16.msra.mxu0 %v334
        %354 = vmatprep.subr.bf16.mxu0 0
        %355 = vmatpush1.bf16.msra.mxu0 %v335
        %356 = vmatprep.subr.bf16.mxu0 0
        %357 = vmatpush1.bf16.msra.mxu0 %v336
        %358 = vmatprep.subr.bf16.mxu0 0
        %359 = vmatpush1.bf16.msra.mxu0 %v337
        %360 = vmatprep.subr.bf16.mxu0 0
        %361 = vmatpush1.bf16.msra.mxu0 %v338
        %362 = vmatprep.subr.bf16.mxu0 0
        %363 = vmatpush1.bf16.msra.mxu0 %v339
        %364 = vmatprep.subr.bf16.mxu0 0
        %365 = vmatpush1.bf16.msra.mxu0 0
        %366 = vmatprep.subr.bf16.mxu0 0
        %367 = vmatpush1.bf16.msra.mxu0 0
        %368 = vmatprep.subr.bf16.mxu0 0
        %369 = vmatpush1.bf16.msra.mxu0 0
        %370 = vmatprep.subr.bf16.mxu0 0
        %371 = vmatpush1.bf16.msra.mxu0 0
        %372 = vmatprep.subr.bf16.mxu0 0
        %373 = vmatpush1.bf16.msra.mxu0 0
        %374 = vmatprep.subr.bf16.mxu0 0
        %375 = vmatpush1.bf16.msra.mxu0 0
        %376 = vmatprep.subr.bf16.mxu0 0
        %377 = vmatpush1.bf16.msra.mxu0 0
        %378 = vmatprep.subr.bf16.mxu0 0
        %379 = vmatpush1.bf16.msra.mxu0 0
        %380 = vmatprep.mubr.bf16.mxu0 0
        %381 = vmatmul.mubr.bf16.gmra.mrb[0].mxu0 %v298
        %v382 = vpop.f32.mrb[0].mxu0
        %v383 = vadd.f32 0.0, %v382
        %v384 = vpop.f32.mrb[0].mxu0
        %v385 = vpop.f32.mrb[0].mxu0
        %v386 = vadd.f32 0.0, %v385
        %v387 = vpop.f32.mrb[0].mxu0
        %388 = vdwg.mxu0
        %v389 = vadd.f32 %v290, %v383
        %v390 = vadd.f32 %v291, %v386
        %391 = vst [vmem:[#allocation2] sm:$0xff] %v389
        %392 = vst [vmem:[#allocation2 + $0x8] sm:$0xff] %v390
        // Predicated region
        $region53: #{tpu_custom_call.1} parent=35 // pred_check
          %p393 = pneg %p263
        $region54: #{tpu_custom_call.1} parent=35 // pred_check_branch
          %395 = sbr.rel (%p393) target = $region56
        $region55: #{tpu_custom_call.1} parent=35 // pred_region
          %v396 = vld [vmem:[#allocation2] sm:$0xff]
          %v397 = vld [vmem:[#allocation2 + $0x8] sm:$0xff]
          %v398 = vpack.c.bf16 %v397, %v396
          %v399 = vld [vmem:[#allocation8] sm:$0xf]
          %v400 = vld [vmem:[#allocation8 + $0x4] sm:$0xf]
          %v401 = vld [vmem:[#allocation8 + $0x8] sm:$0xf]
          %v402 = vld [vmem:[#allocation8 + $0xc] sm:$0xf]
          %v403 = vld [vmem:[#allocation8 + $0x10] sm:$0xf]
          %v404 = vld [vmem:[#allocation8 + $0x14] sm:$0xf]
          %v405 = vld [vmem:[#allocation8 + $0x18] sm:$0xf]
          %v406 = vld [vmem:[#allocation8 + $0x1c] sm:$0xf]
          %v407 = vld [vmem:[#allocation8 + $0x20] sm:$0xf]
          %v408 = vld [vmem:[#allocation8 + $0x24] sm:$0xf]
          %v409 = vld [vmem:[#allocation8 + $0x28] sm:$0xf]
          %v410 = vld [vmem:[#allocation8 + $0x2c] sm:$0xf]
          %v411 = vld [vmem:[#allocation8 + $0x30] sm:$0xf]
          %v412 = vld [vmem:[#allocation8 + $0x34] sm:$0xf]
          %v413 = vld [vmem:[#allocation8 + $0x38] sm:$0xf]
          %v414 = vld [vmem:[#allocation8 + $0x3c] sm:$0xf]
          %v415 = vld [vmem:[%s3] sm:$0x1]
          %v417 = vlaneseq
          %v418 = vshrl.u32 %v417, 7
          %v419 = vsub.s32 0, %v418
          %v420 = vrot.slane %v415, %v419
          %v438 = vunpack.c.l.b16 %v399
          %v439 = vunpack.c.l.b16 %v400
          %v440 = vunpack.c.l.b16 %v401
          %v441 = vunpack.c.l.b16 %v402
          %v442 = vunpack.c.l.b16 %v403
          %v443 = vunpack.c.l.b16 %v404
          %v444 = vunpack.c.l.b16 %v405
          %v445 = vunpack.c.l.b16 %v406
          %v446 = vunpack.c.l.b16 %v407
          %v447 = vunpack.c.l.b16 %v408
          %v448 = vunpack.c.l.b16 %v409
          %v449 = vunpack.c.l.b16 %v410
          %v450 = vunpack.c.l.b16 %v411
          %v451 = vunpack.c.l.b16 %v412
          %v452 = vunpack.c.l.b16 %v413
          %v453 = vunpack.c.l.b16 %v414
          %v454 = vpack.c.b16 %v439, %v438
          %v455 = vpack.c.b16 %v441, %v440
          %v456 = vpack.c.b16 %v443, %v442
          %v457 = vpack.c.b16 %v445, %v444
          %v458 = vpack.c.b16 %v447, %v446
          %v459 = vpack.c.b16 %v449, %v448
          %v460 = vpack.c.b16 %v451, %v450
          %v461 = vpack.c.b16 %v453, %v452
          %470 = vmatprep.subr.bf16.mxu0 0
          %471 = vmatpush1.bf16.msra.mxu0 %v454
          %472 = vmatprep.subr.bf16.mxu0 0
          %473 = vmatpush1.bf16.msra.mxu0 %v455
          %474 = vmatprep.subr.bf16.mxu0 0
          %475 = vmatpush1.bf16.msra.mxu0 %v456
          %476 = vmatprep.subr.bf16.mxu0 0
          %477 = vmatpush1.bf16.msra.mxu0 %v457
          %478 = vmatprep.subr.bf16.mxu0 0
          %479 = vmatpush1.bf16.msra.mxu0 %v458
          %480 = vmatprep.subr.bf16.mxu0 0
          %481 = vmatpush1.bf16.msra.mxu0 %v459
          %482 = vmatprep.subr.bf16.mxu0 0
          %483 = vmatpush1.bf16.msra.mxu0 %v460
          %484 = vmatprep.subr.bf16.mxu0 0
          %485 = vmatpush1.bf16.msra.mxu0 %v461
          %486 = vmatprep.subr.bf16.mxu0 0
          %487 = vmatpush1.bf16.msra.mxu0 0
          %488 = vmatprep.subr.bf16.mxu0 0
          %489 = vmatpush1.bf16.msra.mxu0 0
          %490 = vmatprep.subr.bf16.mxu0 0
          %491 = vmatpush1.bf16.msra.mxu0 0
          %492 = vmatprep.subr.bf16.mxu0 0
          %493 = vmatpush1.bf16.msra.mxu0 0
          %494 = vmatprep.subr.bf16.mxu0 0
          %495 = vmatpush1.bf16.msra.mxu0 0
          %496 = vmatprep.subr.bf16.mxu0 0
          %497 = vmatpush1.bf16.msra.mxu0 0
          %498 = vmatprep.subr.bf16.mxu0 0
          %499 = vmatpush1.bf16.msra.mxu0 0
          %500 = vmatprep.subr.bf16.mxu0 0
          %501 = vmatpush1.bf16.msra.mxu0 0
          %502 = vmatprep.mubr.bf16.mxu0 0
          %503 = vmatmul.mubr.bf16.gmra.mrb[0].mxu0 %v398
          %v504 = vpop.f32.mrb[0].mxu0
          %v505 = vadd.f32 %v420, %v504
          %v506 = vpop.f32.mrb[0].mxu0
          %v507 = vpop.f32.mrb[0].mxu0
          %v508 = vadd.f32 %v420, %v507
          %v509 = vpop.f32.mrb[0].mxu0
          %510 = vdwg.mxu0
          %v511 = vmax.f32 %v505, 0.0
          %v512 = vmax.f32 %v508, 0.0
          %513 = vst [vmem:[%s259] sm:$0xff] %v511
          %514 = vst [vmem:[%s259 + $0x8] sm:$0xff] %v512
        $region56: #{tpu_custom_call.1} parent=35 // pred_fallthru
          _
        %s515 = sand.u32 %s133, 1
        %s516 = scalar_lea.sflag [#allocation5], %s515
        %s517 = sand.u32 %s133, 1
        %s518 = smul.addr %s517, 16
        %s519 = scalar_lea.vmem [#allocation9], %s518
        // Predicated region
        $region57: #{tpu_custom_call.1} parent=35 // pred_check
          %p520 = pneg %p143
        $region58: #{tpu_custom_call.1} parent=35 // pred_check_branch
          %522 = sbr.rel (%p520) target = $region60
        $region59: #{tpu_custom_call.1} parent=35 // pred_region
          %s523 = smul.u32 2, %s26
          %s525 = ssub.s32 256, 256
          %526 = vsyncadd %s516, %s525
          %s527 = smul.addr %s523, 128
          %s528 = scalar_lea.hbm %s4, %s527
          %s529 = sshll.u32 %s519, 4
          %s530 = int_to_ptr.vmem [resolvable:$true] %s529
          %535 = dma.vmem_to_hbm [thread:$0]  %s530, 256, %s528, %s516, 128, 128, 8
        $region60: #{tpu_custom_call.1} parent=35 // pred_fallthru
          _
      $region36: #{tpu_custom_call.1} parent=5 // pred_fallthru
        _
      %p536 = scmp.le.s32.totalorder 2, %s17
      // Predicated region
      $region61: #{tpu_custom_call.1} parent=5 // pred_check
        %p537 = pneg %p536
      $region62: #{tpu_custom_call.1} parent=5 // pred_check_branch
        %539 = sbr.rel (%p537) target = $region64
      $region63: #{tpu_custom_call.1} parent=5 // pred_region
        %s540 = ssub.s32 %s17, 2
        // Predicated region
        $region65: #{tpu_custom_call.1} parent=63 // pred_check
          %p541 = pneg %p149
        $region66: #{tpu_custom_call.1} parent=63 // pred_check_branch
          %543 = sbr.rel (%p541) target = $region68
        $region67: #{tpu_custom_call.1} parent=63 // pred_region
          %s544 = sand.u32 %s134, 1
          %s545 = scalar_lea.sflag [#allocation5], %s544
          %s546 = sand.u32 %s134, 1
          %s547 = smul.addr %s546, 16
          %s548 = scalar_lea.vmem [#allocation9], %s547
          %549 = dma.done %s545, 256
        $region68: #{tpu_custom_call.1} parent=63 // pred_fallthru
          _
      $region64: #{tpu_custom_call.1} parent=5 // pred_fallthru
        _
    $region6: #{tpu_custom_call.1} parent=1 // loop_footer
      %s21 = sadd.s32 1, %s17
    $region7: #{tpu_custom_call.1} parent=1 // loop_footer_branch
      %16 = sbr.rel target = $region3
    $region8: #{tpu_custom_call.1} parent=1 // loop_exit
      _
    %550 = vsyncpa [#allocation4], 1
    %s551 = scalar_lea.sflag [#allocation4], 1
    %552 = vsyncpa %s551, 1
    %553 = vsyncpa [#allocation7], 1
    %554 = vsyncpa [#allocation5], 1
    %s555 = scalar_lea.sflag [#allocation5], 1
    %556 = vsyncpa %s555, 1

</llo_original>
